<compile_context>
chip_gen: v5e
topology: v5e:2x2
jax: 0.10.0
libtpu: 0.0.40
codegen_flags: <defaults>
</compile_context>

<pallas_src>
import functools
import math

import jax
import jax.numpy as jnp
from jax import lax
from jax.experimental import pallas as pl
from jax.experimental.pallas import tpu as pltpu


_NEG_BIG = -1e30  # finite "minus infinity" so masked reductions never see inf - inf


def _round_up(a, b):
    return (a + b - 1) // b * b


def _smooth_top1_svm_kernel(x_ref, y_ref, out_ref, *, alpha, tau, thresh, n_rows):
    """x_ref: (C, tb) scores (classes on sublanes, batch on lanes).
       y_ref: (1, tb) int32 labels.  out_ref: (1, 8, 128) partial block sum."""
    c, tb = x_ref.shape

    x = x_ref[...].astype(jnp.float32)          # (C, tb), cast in-kernel (bf16 transport ok)
    y = y_ref[...]                              # (1, tb) int32

    zero = jnp.float32(0.0)
    one = jnp.float32(1.0)
    neg = jnp.float32(_NEG_BIG)
    alpha_f = jnp.float32(alpha)
    tau_f = jnp.float32(tau)
    inv_tau = jnp.float32(1.0 / tau)
    thr = jnp.float32(float(tau) * math.log(float(thresh)))

    cls = lax.broadcasted_iota(jnp.int32, (c, tb), 0)        # class index per sublane
    onehot = cls == y                                         # (C, tb)

    # Ground-truth score via masked sum (one sublane reduction).
    true_score = jnp.sum(jnp.where(onehot, x, zero), axis=0, keepdims=True)   # (1, tb)

    # Top-1 / top-2 for detect_large (k=1): hard = (m1 - m2) >= tau*log(thresh).
    m1 = jnp.max(x, axis=0, keepdims=True)                                    # (1, tb)
    is_max = x == m1
    count_max = jnp.sum(jnp.where(is_max, one, zero), axis=0, keepdims=True)  # (1, tb)
    m2_strict = jnp.max(jnp.where(is_max, neg, x), axis=0, keepdims=True)     # (1, tb)
    m2 = jnp.where(count_max > 1.5, m1, m2_strict)            # second-largest incl. ties
    hard = (m1 - m2) >= thr                                                   # (1, tb)

    # max_j (x_j + delta_j) without another full reduction:
    #   max_{j != y} x_j = m1 unless y is the unique argmax, in which case m2.
    max_other = jnp.where(true_score < m1, m1, m2)
    max_xd = jnp.maximum(max_other + alpha_f, true_score)
    hard_loss = max_xd - true_score                                            # (1, tb)

    # Smooth loss: tau * logsumexp((x + delta - true_score)/tau)
    #            = hard_loss + tau * log(sum_j exp((xd_j - max_xd)/tau))
    xd = x + jnp.where(onehot, zero, alpha_f)                                  # (C, tb)
    e = jnp.exp((xd - max_xd) * inv_tau)                                       # all exps <= 0
    sum_exp = jnp.sum(e, axis=0, keepdims=True)                                # (1, tb)
    smooth_loss = hard_loss + tau_f * jnp.log(sum_exp)

    per_row = jnp.where(hard, hard_loss, smooth_loss)                          # (1, tb)

    # Mask out lanes belonging to the (possibly OOB-read) batch tail of the last block.
    col = lax.broadcasted_iota(jnp.int32, (1, tb), 1) + pl.program_id(0) * tb
    per_row = jnp.where(col < n_rows, per_row, zero)

    block_sum = jnp.sum(per_row)
    out_ref[...] = jnp.broadcast_to(block_sum, out_ref.shape).astype(jnp.float32)


def smooth_top1_svm(x, y, *, alpha=1.0, tau=1.0, thresh=1000.0, block_rows=None):
    """x: (B, C) float (f32 or bf16), y: (B,) int labels. Returns scalar f32 loss."""
    B, C = x.shape
    assert C >= 2, "SmoothTop1SVM needs at least 2 classes (top-2 is taken)."
    itemsize = jnp.dtype(x.dtype).itemsize

    # Layout: classes on sublanes, batch on lanes -> lane-dense vregs, short
    # sublane reductions, and no 128-lane class padding anywhere.
    xt = x.T                                        # (C, B)
    yt = y.astype(jnp.int32).reshape(1, B)          # (1, B) lane-major labels

    # --- row-tile (lane) size from an explicit VMEM budget -------------------
    sub_in = 16 if itemsize == 2 else 8             # sublane packing of the input dtype
    c_in = _round_up(C, sub_in)                     # input block sublane footprint
    c_f32 = _round_up(C, 8)                         # f32 temporaries sublane footprint
    # per-batch-element VMEM bytes: double-buffered x input + double-buffered y
    # (padded to 8 sublanes) + ~7 tile-sized f32 temporaries in the kernel body.
    per_lane = 2 * c_in * itemsize + 2 * 8 * 4 + 7 * c_f32 * 4

    if block_rows is None:
        tb = (16 * 1024 * 1024) // per_lane         # ~16 MiB working set (v7x-safe)
        tb = min(32768, max(128, (tb // 128) * 128))
    else:
        tb = max(128, _round_up(int(block_rows), 128))

    if B > 256:
        # Keep >= 2 blocks so v7x can shard the parallel batch axis over both TCs.
        tb = min(tb, _round_up((B + 1) // 2, 128))
    if tb >= B:
        tb = B                                      # single full-batch block (full-dim exception)

    num_blocks = -(-B // tb)
    vmem_limit = max(32 * 1024 * 1024, int(per_lane * tb * 5 // 4))

    kernel = functools.partial(
        _smooth_top1_svm_kernel,
        alpha=float(alpha), tau=float(tau), thresh=float(thresh), n_rows=B,
    )

    partial_sums = pl.pallas_call(
        kernel,
        out_shape=jax.ShapeDtypeStruct((num_blocks, 8, 128), jnp.float32),
        grid=(num_blocks,),
        in_specs=[
            pl.BlockSpec((C, tb), lambda i: (0, i)),   # class dim = full array dim
            pl.BlockSpec((1, tb), lambda i: (0, i)),   # lane-major labels
        ],
        out_specs=pl.BlockSpec((1, 8, 128), lambda i: (i, 0, 0)),
        compiler_params=pltpu.CompilerParams(
            dimension_semantics=("parallel",),
            vmem_limit_bytes=vmem_limit,
        ),
    )(xt, yt)

    return partial_sums[:, 0, 0].sum() / jnp.float32(B)


def _reference_loss(x, y, alpha=1.0, tau=1.0, thresh=1000.0):
    """Pure-JAX reference mirroring the PyTorch forward."""
    x = x.astype(jnp.float32)
    B, C = x.shape
    col = jnp.arange(C)
    d = alpha * (col[None, :] != y[:, None]).astype(jnp.float32)
    true_score = jnp.take_along_axis(x, y[:, None], axis=1)
    top2 = jax.lax.top_k(x, 2)[0]
    hard = (top2[:, 0] - top2[:, 1]) >= tau * jnp.log(thresh)
    hard_l = jnp.max(x + d, axis=1) - true_score[:, 0]
    z = (x + d - true_score) / tau
    smooth_l = tau * jax.scipy.special.logsumexp(z, axis=1)
    per = jnp.where(hard, hard_l, smooth_l)
    return jnp.sum(per) / B


if __name__ == "__main__":
    key = jax.random.PRNGKey(0)
    k1, k2, k3, k4, k5, k6 = jax.random.split(key, 6)

    # Test 1: n_classes=8, batch=8, f32 (single full-batch block, both branches).
    B, C = 8, 8
    x = jax.random.normal(k1, (B, C), dtype=jnp.float32)
    y = jax.random.randint(k2, (B,), 0, C)
    x = x.at[jnp.arange(B), y].add(jnp.where(jnp.arange(B) < B // 2, 20.0, 0.0))
    loss = smooth_top1_svm(x, y, alpha=1.0, tau=1.0)
    jax.block_until_ready(loss)
    ref = _reference_loss(x, y, alpha=1.0, tau=1.0)
    assert jnp.allclose(loss, ref, rtol=2e-4, atol=2e-4), (loss, ref)

    # Test 2: bf16 transport, batch=300, n_classes=10, forced 128-row blocks
    # (multi-block grid + tail-lane masking).
    B2, C2 = 300, 10
    x2 = jax.random.normal(k3, (B2, C2), dtype=jnp.float32)
    y2 = jax.random.randint(k4, (B2,), 0, C2)
    x2 = x2.at[jnp.arange(B2), y2].add(jnp.where(jnp.arange(B2) % 2 == 0, 15.0, 0.0))
    x2b = x2.astype(jnp.bfloat16)
    loss2 = smooth_top1_svm(x2b, y2, alpha=1.0, tau=1.0, block_rows=128)
    jax.block_until_ready(loss2)
    ref2 = _reference_loss(x2b.astype(jnp.float32), y2, alpha=1.0, tau=1.0)
    assert jnp.allclose(loss2, ref2, rtol=2e-4, atol=2e-4), (loss2, ref2)

    # Test 3: binary MIL case (n_classes=2), batch=50, f32.
    B3, C3 = 50, 2
    x3 = jax.random.normal(k5, (B3, C3), dtype=jnp.float32)
    y3 = jax.random.randint(k6, (B3,), 0, C3)
    x3 = x3.at[jnp.arange(B3), y3].add(jnp.where(jnp.arange(B3) % 3 == 0, 10.0, 0.0))
    loss3 = smooth_top1_svm(x3, y3, alpha=1.0, tau=1.0)
    jax.block_until_ready(loss3)
    ref3 = _reference_loss(x3, y3, alpha=1.0, tau=1.0)
    assert jnp.allclose(loss3, ref3, rtol=2e-4, atol=2e-4), (loss3, ref3)

    print("KERNEL_OK")
</pallas_src>

<mosaic_0001>
module attributes {stable_mosaic.version = 11 : i64} {
  func.func @_smooth_top1_svm_kernel(%arg0: i32, %arg1: memref<8x8xf32, #tpu.memory_space<vmem>>, %arg2: memref<1x8xi32, #tpu.memory_space<vmem>>, %arg3: memref<1x8x128xf32, #tpu.memory_space<vmem>>) attributes {dimension_semantics = [#tpu.dimension_semantics<parallel>], iteration_bounds = array<i64: 1>, scalar_prefetch = 0 : i64, scratch_operands = 0 : i64, tpu.core_type = #tpu.core_type<tc>, window_params = [{transform_indices = @transform_0, window_bounds = array<i64: 8, 8>}, {transform_indices = @transform_1, window_bounds = array<i64: 1, 8>}, {transform_indices = @transform_2, window_bounds = array<i64: 1, 8, 128>}]} {
    %c0 = arith.constant 0 : index
    %c0_0 = arith.constant 0 : index
    %0 = vector.load %arg1[%c0, %c0_0] : memref<8x8xf32, #tpu.memory_space<vmem>>, vector<8x8xf32>
    %c0_1 = arith.constant 0 : index
    %c0_2 = arith.constant 0 : index
    %1 = vector.load %arg2[%c0_1, %c0_2] : memref<1x8xi32, #tpu.memory_space<vmem>>, vector<1x8xi32>
    %2 = tpu.iota {dimensions = array<i32: 0>} : vector<8x8xi32>
    %3 = vector.broadcast %1 : vector<1x8xi32> to vector<8x8xi32>
    %4 = arith.cmpi eq, %2, %3 : vector<8x8xi32>
    %cst = arith.constant 0.000000e+00 : f32
    %5 = vector.broadcast %cst : f32 to vector<8x8xf32>
    %6 = arith.select %4, %0, %5 : vector<8x8xi1>, vector<8x8xf32>
    %cst_3 = arith.constant dense<0.000000e+00> : vector<8xf32>
    %7 = vector.multi_reduction <add>, %6, %cst_3 [0] : vector<8x8xf32> to vector<8xf32>
    %8 = vector.shape_cast %7 : vector<8xf32> to vector<1x8xf32>
    %cst_4 = arith.constant dense<0xFF800000> : vector<8xf32>
    %9 = vector.multi_reduction <maximumf>, %0, %cst_4 [0] : vector<8x8xf32> to vector<8xf32>
    %10 = vector.shape_cast %9 : vector<8xf32> to vector<1x8xf32>
    %11 = vector.broadcast %10 : vector<1x8xf32> to vector<8x8xf32>
    %12 = arith.cmpf oeq, %0, %11 : vector<8x8xf32>
    %cst_5 = arith.constant 1.000000e+00 : f32
    %cst_6 = arith.constant 0.000000e+00 : f32
    %13 = vector.broadcast %cst_5 : f32 to vector<8x8xf32>
    %14 = vector.broadcast %cst_6 : f32 to vector<8x8xf32>
    %15 = arith.select %12, %13, %14 : vector<8x8xi1>, vector<8x8xf32>
    %cst_7 = arith.constant dense<0.000000e+00> : vector<8xf32>
    %16 = vector.multi_reduction <add>, %15, %cst_7 [0] : vector<8x8xf32> to vector<8xf32>
    %17 = vector.shape_cast %16 : vector<8xf32> to vector<1x8xf32>
    %cst_8 = arith.constant -1.000000e+30 : f32
    %18 = vector.broadcast %cst_8 : f32 to vector<8x8xf32>
    %19 = arith.select %12, %18, %0 : vector<8x8xi1>, vector<8x8xf32>
    %cst_9 = arith.constant dense<0xFF800000> : vector<8xf32>
    %20 = vector.multi_reduction <maximumf>, %19, %cst_9 [0] : vector<8x8xf32> to vector<8xf32>
    %21 = vector.shape_cast %20 : vector<8xf32> to vector<1x8xf32>
    %cst_10 = arith.constant 1.500000e+00 : f32
    %22 = vector.broadcast %cst_10 : f32 to vector<1x8xf32>
    %23 = arith.cmpf ogt, %17, %22 : vector<1x8xf32>
    %24 = arith.select %23, %10, %21 : vector<1x8xi1>, vector<1x8xf32>
    %25 = arith.subf %10, %24 : vector<1x8xf32>
    %cst_11 = arith.constant 6.90775537 : f32
    %26 = vector.broadcast %cst_11 : f32 to vector<1x8xf32>
    %27 = arith.cmpf oge, %25, %26 : vector<1x8xf32>
    %28 = arith.cmpf olt, %8, %10 : vector<1x8xf32>
    %29 = arith.select %28, %10, %24 : vector<1x8xi1>, vector<1x8xf32>
    %cst_12 = arith.constant 1.000000e+00 : f32
    %30 = vector.broadcast %cst_12 : f32 to vector<1x8xf32>
    %31 = arith.addf %29, %30 : vector<1x8xf32>
    %32 = arith.maximumf %31, %8 : vector<1x8xf32>
    %33 = arith.subf %32, %8 : vector<1x8xf32>
    %cst_13 = arith.constant 0.000000e+00 : f32
    %cst_14 = arith.constant 1.000000e+00 : f32
    %34 = vector.broadcast %cst_13 : f32 to vector<8x8xf32>
    %35 = vector.broadcast %cst_14 : f32 to vector<8x8xf32>
    %36 = arith.select %4, %34, %35 : vector<8x8xi1>, vector<8x8xf32>
    %37 = arith.addf %0, %36 : vector<8x8xf32>
    %38 = vector.broadcast %32 : vector<1x8xf32> to vector<8x8xf32>
    %39 = arith.subf %37, %38 : vector<8x8xf32>
    %cst_15 = arith.constant 1.000000e+00 : f32
    %40 = vector.broadcast %cst_15 : f32 to vector<8x8xf32>
    %41 = arith.mulf %39, %40 : vector<8x8xf32>
    %42 = math.exp %41 : vector<8x8xf32>
    %cst_16 = arith.constant dense<0.000000e+00> : vector<8xf32>
    %43 = vector.multi_reduction <add>, %42, %cst_16 [0] : vector<8x8xf32> to vector<8xf32>
    %44 = vector.shape_cast %43 : vector<8xf32> to vector<1x8xf32>
    %45 = math.log %44 : vector<1x8xf32>
    %cst_17 = arith.constant 1.000000e+00 : f32
    %46 = vector.broadcast %cst_17 : f32 to vector<1x8xf32>
    %47 = arith.mulf %46, %45 : vector<1x8xf32>
    %48 = arith.addf %33, %47 : vector<1x8xf32>
    %49 = arith.select %27, %33, %48 : vector<1x8xi1>, vector<1x8xf32>
    %50 = tpu.iota {dimensions = array<i32: 1>} : vector<1x8xi32>
    %c8_i32 = arith.constant 8 : i32
    %51 = arith.muli %arg0, %c8_i32 : i32
    %52 = vector.broadcast %51 : i32 to vector<1x8xi32>
    %53 = arith.addi %50, %52 : vector<1x8xi32>
    %c8_i32_18 = arith.constant 8 : i32
    %54 = vector.broadcast %c8_i32_18 : i32 to vector<1x8xi32>
    %55 = arith.cmpi slt, %53, %54 : vector<1x8xi32>
    %cst_19 = arith.constant 0.000000e+00 : f32
    %56 = vector.broadcast %cst_19 : f32 to vector<1x8xf32>
    %57 = arith.select %55, %49, %56 : vector<1x8xi1>, vector<1x8xf32>
    %58 = vector.shape_cast %57 : vector<1x8xf32> to vector<1x1x8xf32>
    %cst_20 = arith.constant dense<0.000000e+00> : vector<1xf32>
    %59 = vector.multi_reduction <add>, %58, %cst_20 [1, 2] : vector<1x1x8xf32> to vector<1xf32>
    %60 = vector.shape_cast %59 : vector<1xf32> to vector<1x1x1xf32>
    %61 = vector.extract %60[0, 0, 0] : f32 from vector<1x1x1xf32>
    %62 = vector.broadcast %61 : f32 to vector<1x8x128xf32>
    %c0_21 = arith.constant 0 : index
    %c0_22 = arith.constant 0 : index
    %c0_23 = arith.constant 0 : index
    %63 = vector.load %arg3[%c0_21, %c0_22, %c0_23] : memref<1x8x128xf32, #tpu.memory_space<vmem>>, vector<1x8x128xf32>
    tpu.vector_store %arg3[%c0_21, %c0_22, %c0_23], %62 {strides = array<i32>} : memref<1x8x128xf32, #tpu.memory_space<vmem>>, vector<1x8x128xf32>,
    return
  }
  func.func @transform_0(%arg0: i32) -> (i32, i32) {
    %c0_i32 = arith.constant 0 : i32
    %c0_i32_0 = arith.constant 0 : i32
    return %c0_i32, %arg0 : i32, i32
  }
  func.func @transform_1(%arg0: i32) -> (i32, i32) {
    %c0_i32 = arith.constant 0 : i32
    %c0_i32_0 = arith.constant 0 : i32
    return %c0_i32, %arg0 : i32, i32
  }
  func.func @transform_2(%arg0: i32) -> (i32, i32, i32) {
    %c0_i32 = arith.constant 0 : i32
    %c0_i32_0 = arith.constant 0 : i32
    %c0_i32_1 = arith.constant 0 : i32
    return %arg0, %c0_i32, %c0_i32_0 : i32, i32, i32
  }
}

</mosaic_0001>

<llo_original>
// kernel: tpu_custom_call.1
$region0: #{tpu_custom_call.1}
  #allocation0 [shape = 'u32[]', space=smem, size = 0x4, offset = 0x4, fixed_abs, tag = 'smem constant byte address 0x4 - core index']
  #allocation1 [shape = 'u32[72,128]{1,0:T(1,128)}', space=vmem, size = 0x9000, scoped, tag = 'internal scratch']
  %s0 = inlined_call_operand.hbm [shape: f32[8,8], index: 0, kind: input, shape index: {}]
  %s1 = inlined_call_operand.hbm [shape: s32[1,8], index: 1, kind: input, shape index: {}]
  %s2 = inlined_call_operand.hbm [shape: f32[1,8,128], index: 2, kind: output, shape index: {}]
  %s3 = sld [smem:[#allocation0]]
  $region26: #{tpu_custom_call.1} parent=0
    _
  %s5 = ssub.s32 1, %s3
  %s6 = scalar_select 0, %s5, %s3
  $region1: #{tpu_custom_call.1} parent=0
    #allocation2 [shape = 'u8[4096]{0}', space=vmem, size = 0x1000, scoped, tag = 'input window, operand 0, single buffered']
    #allocation3 [shape = 's32[1]{0}', space=sflag, size = 0x4, scoped, tag = 'scoped memory for tpu_custom_call.1']
    #allocation4 [shape = 's32[1]{0}', space=sflag, size = 0x4, scoped, tag = 'scoped memory for tpu_custom_call.1']
    #allocation5 [shape = 'u8[512]{0}', space=vmem, size = 0x400, scoped, tag = 'input window, operand 1, single buffered']
    #allocation6 [shape = 's32[1]{0}', space=sflag, size = 0x4, scoped, tag = 'scoped memory for tpu_custom_call.1']
    #allocation7 [shape = 'u8[4096]{0}', space=vmem, size = 0x1000, scoped, tag = 'output window, operand 0, single buffered']
    %7 = vsyncpa [#allocation3], 0
    %8 = vsyncpa [#allocation6], 0
    %9 = vsyncpa [#allocation4], 0
    // Predicated region
    $region2: #{tpu_custom_call.1} parent=1 // pred_check
      _
    $region3: #{tpu_custom_call.1} parent=1 // pred_check_branch
      %11 = sbr.rel (0) target = $region5
    $region4: #{tpu_custom_call.1} parent=1 // pred_region
      %13 = vsyncadd [#allocation3], 0
      %s15 = sshll.u32 %s0, 4
      %s16 = int_to_ptr.hbm [resolvable:$true] %s15
      %s17 = sshll.u32 [#allocation2], 4
      %s18 = int_to_ptr.vmem [resolvable:$true] %s17
      %20 = dma.hbm_to_vmem [thread:$0]  %s16, 128, %s18, [#allocation3]
    $region5: #{tpu_custom_call.1} parent=1 // pred_fallthru
      _
    // Predicated region
    $region6: #{tpu_custom_call.1} parent=1 // pred_check
      _
    $region7: #{tpu_custom_call.1} parent=1 // pred_check_branch
      %22 = sbr.rel (0) target = $region9
    $region8: #{tpu_custom_call.1} parent=1 // pred_region
      %24 = vsyncadd [#allocation6], 0
      %s26 = sshll.u32 %s1, 4
      %s27 = int_to_ptr.hbm [resolvable:$true] %s26
      %s28 = sshll.u32 [#allocation5], 4
      %s29 = int_to_ptr.vmem [resolvable:$true] %s28
      %31 = dma.hbm_to_vmem [thread:$0]  %s27, 16, %s29, [#allocation6]
    $region9: #{tpu_custom_call.1} parent=1 // pred_fallthru
      _
    // Predicated region
    $region10: #{tpu_custom_call.1} parent=1 // pred_check
      _
    $region11: #{tpu_custom_call.1} parent=1 // pred_check_branch
      %33 = sbr.rel (0) target = $region13
    $region12: #{tpu_custom_call.1} parent=1 // pred_region
      %35 = dma.done [#allocation3], 128
    $region13: #{tpu_custom_call.1} parent=1 // pred_fallthru
      _
    // Predicated region
    $region14: #{tpu_custom_call.1} parent=1 // pred_check
      _
    $region15: #{tpu_custom_call.1} parent=1 // pred_check_branch
      %37 = sbr.rel (0) target = $region17
    $region16: #{tpu_custom_call.1} parent=1 // pred_region
      %39 = dma.done [#allocation6], 16
    $region17: #{tpu_custom_call.1} parent=1 // pred_fallthru
      _
    %v40 = vld [vmem:[#allocation2] sm:$0xff]
    %v41 = vld [vmem:[#allocation5] sm:$0x1]
    %v42 = vlaneseq
    %v43 = vshrl.u32 %v42, 7
    %v44 = vperm.slane %v41, 0
    %vm45 = vcmp.eq.s32.totalorder %v43, %v44
    %v46 = vsel %vm45, %v40, 0.0
    %vm47 = vcmask 64512
    %v48 = vsel %vm47, %v46, 0.0
    %v49 = vrot.slane %v48, 4
    %v50 = vadd.f32 %v48, %v49
    %v51 = vrot.slane %v50, 2
    %v52 = vadd.f32 %v50, %v51
    %v53 = vrot.slane %v52, 1
    %v54 = vadd.f32 %v52, %v53
    %v55 = vsel %vm47, %v40, -inf
    %v56 = vrot.slane %v55, 4
    %v57 = vmax.f32 %v55, %v56
    %v58 = vrot.slane %v57, 2
    %v59 = vmax.f32 %v57, %v58
    %v60 = vrot.slane %v59, 1
    %v61 = vmax.f32 %v59, %v60
    %vm62 = vcmp.eq.f32.partialorder %v40, %v61
    %v63 = vsel %vm62, 1.0, 0.0
    %v64 = vsel %vm47, %v63, 0.0
    %v65 = vrot.slane %v64, 4
    %v66 = vadd.f32 %v64, %v65
    %v67 = vrot.slane %v66, 2
    %v68 = vadd.f32 %v66, %v67
    %v69 = vrot.slane %v68, 1
    %v70 = vadd.f32 %v68, %v69
    %v71 = vsel %vm62, -1e+30, %v40
    %v72 = vsel %vm47, %v71, -inf
    %v73 = vrot.slane %v72, 4
    %v74 = vmax.f32 %v72, %v73
    %v75 = vrot.slane %v74, 2
    %v76 = vmax.f32 %v74, %v75
    %v77 = vrot.slane %v76, 1
    %v78 = vmax.f32 %v76, %v77
    %vm79 = vcmp.gt.f32.partialorder %v70, 1.5
    %v80 = vsel %vm79, %v61, %v78
    %v81 = vsub.f32 %v61, %v80
    %vm82 = vcmp.ge.f32.partialorder %v81, 6.9077554
    %vm83 = vcmp.lt.f32.partialorder %v54, %v61
    %v84 = vsel %vm83, %v61, %v80
    %v85 = vadd.f32 %v84, 1.0
    %v86 = vmax.f32 %v85, %v54
    %v87 = vsub.f32 %v86, %v54
    %v88 = vsel %vm45, 0.0, 1.0
    %v89 = vadd.f32 %v40, %v88
    %v90 = vsub.f32 %v89, %v86
    %v91 = vmul.f32 %v90, 1.442695
    %v92 = vpow.pop %v91
    %v93 = vsel %vm47, %v92, 0.0
    %v94 = vrot.slane %v93, 4
    %v95 = vadd.f32 %v93, %v94
    %v96 = vrot.slane %v95, 2
    %v97 = vadd.f32 %v95, %v96
    %v98 = vrot.slane %v97, 1
    %v99 = vadd.f32 %v97, %v98
    %v100 = vlog2.pop %v99
    %v101 = vmul.f32 %v100, 0.6931472
    %v102 = vadd.f32 %v87, %v101
    %v103 = vsel %vm82, %v87, %v102
    %v104 = vlaneseq
    %v105 = vand.u32 %v104, 127
    %s106 = smul.u32 0, 8
    %v107 = vstv %s106
    %v108 = vadd.s32 %v105, %v107
    %vm109 = vcmp.lt.s32.totalorder %v108, 8
    %v110 = vsel %vm109, %v103, 0.0
    %vm111 = vcmask 57344
    %v112 = vsel %vm111, %v110, 0.0
    %113 = vadd.xlane.f32.xlu0 %v112
    %v114 = vpop.xlane.xlu0 %113
    %v115 = vrot.slane %v114, 4
    %v116 = vadd.f32 %v114, %v115
    %v117 = vrot.slane %v116, 2
    %v118 = vadd.f32 %v116, %v117
    %v119 = vrot.slane %v118, 1
    %v120 = vadd.f32 %v118, %v119
    %s121 = vtos %v120
    %v122 = vstv %s121
    %123 = vst [vmem:[#allocation7] sm:$0xff] %v122
    // Predicated region
    $region18: #{tpu_custom_call.1} parent=1 // pred_check
      _
    $region19: #{tpu_custom_call.1} parent=1 // pred_check_branch
      %125 = sbr.rel (0) target = $region21
    $region20: #{tpu_custom_call.1} parent=1 // pred_region
      %127 = vsyncadd [#allocation4], 0
      %s129 = sshll.u32 [#allocation7], 4
      %s130 = int_to_ptr.vmem [resolvable:$true] %s129
      %s131 = sshll.u32 %s2, 4
      %s132 = int_to_ptr.hbm [resolvable:$true] %s131
      %134 = dma.vmem_to_hbm [thread:$0]  %s130, 128, %s132, [#allocation4]
    $region21: #{tpu_custom_call.1} parent=1 // pred_fallthru
      _
    // Predicated region
    $region22: #{tpu_custom_call.1} parent=1 // pred_check
      _
    $region23: #{tpu_custom_call.1} parent=1 // pred_check_branch
      %136 = sbr.rel (0) target = $region25
    $region24: #{tpu_custom_call.1} parent=1 // pred_region
      %138 = dma.done [#allocation4], 128
    $region25: #{tpu_custom_call.1} parent=1 // pred_fallthru
      _
    %139 = vsyncpa [#allocation3], 1
    %140 = vsyncpa [#allocation6], 1
    %141 = vsyncpa [#allocation4], 1

</llo_original>
